<compile_context>
chip_gen: v5e
topology: v5e:2x2
jax: 0.10.0
libtpu: 0.0.40
codegen_flags: <defaults>
</compile_context>

<pallas_src>
import functools

import jax
import jax.numpy as jnp
import numpy as np
from jax import lax
from jax.experimental import pallas as pl
from jax.experimental.pallas import tpu as pltpu

EPS = 1e-5
_MB = 1024 * 1024


def _round_up(x, m):
    return ((x + m - 1) // m) * m


def _vmem_budget_bytes(vmem_limit_mb):
    """Clamp the requested scoped-VMEM limit to ~0.85x physical VMEM."""
    try:
        phys = int(pltpu.get_tpu_info().vmem_capacity_bytes)
    except Exception:  # conservative fallback (v7x per-TensorCore VMEM)
        phys = 64 * _MB
    want = (vmem_limit_mb * _MB) if vmem_limit_mb is not None else 96 * _MB
    return int(min(want, int(0.85 * phys)))


def _pick_tm(M, per_row_bytes, resident_bytes, budget, block_rows):
    """Largest row tile that fits VMEM, targeting >= 4 grid steps."""
    avail = max(budget - resident_bytes, 8 * per_row_bytes)
    cap = max(8, (avail // per_row_bytes) // 8 * 8)
    tm = max(8, min(block_rows, _round_up(M, 8), cap) // 8 * 8)
    # >= 4 steps => >= 2 steps per TensorCore on dual-core chips (keeps the
    # x-tile prefetch / output writeback pipelined even for small M).
    while tm > 8 and pl.cdiv(M, tm) < 4:
        tm = max(8, _round_up(tm // 2, 8))
    return tm


def _layernorm_f32(x_ref, g_ref, b_ref):
    """Single-pass LayerNorm over the last axis, statistics in f32."""
    x = x_ref[...].astype(jnp.float32)
    inv_d = 1.0 / x.shape[-1]
    s1 = jnp.sum(x, axis=-1, keepdims=True)
    s2 = jnp.sum(x * x, axis=-1, keepdims=True)
    mean = s1 * inv_d
    var = s2 * inv_d - mean * mean          # biased, matches nn.LayerNorm
    inv = lax.rsqrt(var + EPS)
    return (x - mean) * inv * g_ref[...] + b_ref[...]


def _prenorm_linear_kernel(x_ref, g_ref, b_ref, w_ref, wb_ref, o_ref):
    # x_ref: (TM, D); g/b/wb: (1, D) f32; w_ref: (D, D) resident, native dtype.
    y = _layernorm_f32(x_ref, g_ref, b_ref).astype(w_ref.dtype)
    out = jnp.dot(y, w_ref[...], preferred_element_type=jnp.float32)
    o_ref[...] = (out + wb_ref[...]).astype(o_ref.dtype)


def _prenorm_linear_colsplit_kernel(x_ref, g_ref, b_ref, w_ref, wb_ref, o_ref,
                                    y_ref):
    # x_ref: (TM, D); w_ref: (D, TN); wb_ref: (1, TN); o_ref: (TM, TN)
    # y_ref: (TM, D) VMEM scratch holding the normalized tile (W's dtype),
    # computed once per row block (column axis is innermost / "arbitrary").
    @pl.when(pl.program_id(1) == 0)
    def _():
        y_ref[...] = _layernorm_f32(x_ref, g_ref, b_ref).astype(y_ref.dtype)

    out = jnp.dot(y_ref[...], w_ref[...], preferred_element_type=jnp.float32)
    o_ref[...] = (out + wb_ref[...]).astype(o_ref.dtype)


@functools.partial(jax.jit,
                   static_argnames=("block_rows", "col_block", "vmem_limit_mb"))
def prenorm_linear(x, gamma, beta, w, wb, *, block_rows=256, col_block=None,
                   vmem_limit_mb=None):
    """Fused LayerNorm(D) + Linear(D, D).  x: (B, N, D) -> (B, N, D)."""
    B, N, D = x.shape
    M = B * N
    x2 = x.reshape(M, D)

    xi = jnp.dtype(x.dtype).itemsize
    wi = jnp.dtype(w.dtype).itemsize

    # Small operands pre-cast once in the wrapper (no per-step VPU casts).
    gamma2 = gamma.reshape(1, D).astype(jnp.float32)
    beta2 = beta.reshape(1, D).astype(jnp.float32)
    wb2 = wb.reshape(1, D).astype(jnp.float32)

    budget = _vmem_budget_bytes(vmem_limit_mb)
    w_bytes = D * D * wi

    # Resident-W vs column-split (W streamed in (D, tn) output-column tiles).
    tn = None
    if col_block is not None:
        if D % col_block == 0 and col_block % 128 == 0:
            tn = col_block
    elif w_bytes > budget // 2 and D % 128 == 0:
        tn = 256 if D % 256 == 0 else 128

    def _params(sem):
        return pltpu.CompilerParams(dimension_semantics=sem,
                                    vmem_limit_bytes=budget)

    if tn is None:
        # Resident-W path: W + gamma/beta/bias live in VMEM, single-buffered.
        resident = w_bytes + 3 * D * 4
        per_row = (2 * D * xi        # x tile, double-buffered
                   + 2 * D * xi      # out tile, double-buffered
                   + 4 * D * 4       # f32 LayerNorm temporaries
                   + D * wi)         # normalized tile cast to W's dtype
        tm = _pick_tm(M, per_row, resident, budget, block_rows)
        grid_m = pl.cdiv(M, tm)
        cost = pl.CostEstimate(
            flops=2 * M * D * D,
            transcendentals=M,
            bytes_accessed=M * D * xi + w_bytes + M * D * xi)
        out2 = pl.pallas_call(
            _prenorm_linear_kernel,
            out_shape=jax.ShapeDtypeStruct((M, D), x.dtype),
            grid=(grid_m,),
            in_specs=[
                pl.BlockSpec((tm, D), lambda i: (i, 0)),
                pl.BlockSpec((1, D), lambda i: (0, 0),
                             pipeline_mode=pl.Buffered(1)),
                pl.BlockSpec((1, D), lambda i: (0, 0),
                             pipeline_mode=pl.Buffered(1)),
                pl.BlockSpec((D, D), lambda i: (0, 0),
                             pipeline_mode=pl.Buffered(1)),
                pl.BlockSpec((1, D), lambda i: (0, 0),
                             pipeline_mode=pl.Buffered(1)),
            ],
            out_specs=pl.BlockSpec((tm, D), lambda i: (i, 0)),
            compiler_params=_params(("parallel",)),
            cost_estimate=cost,
        )(x2, gamma2, beta2, w, wb2)
    else:
        # Column-split path for large D: W streamed as (D, tn) tiles, the
        # normalized row tile staged once per row block in VMEM scratch.
        resident = 2 * D * tn * wi + 2 * tn * 4 + 2 * D * 4
        per_row = (2 * D * xi        # x tile, double-buffered
                   + D * wi          # normalized scratch
                   + 4 * D * 4       # f32 LayerNorm temporaries
                   + 2 * tn * xi)    # out tile, double-buffered
        tm = _pick_tm(M, per_row, resident, budget, block_rows)
        grid_m = pl.cdiv(M, tm)
        grid_n = D // tn
        cost = pl.CostEstimate(
            flops=2 * M * D * D,
            transcendentals=M,
            bytes_accessed=M * D * xi + grid_m * w_bytes + M * D * xi)
        out2 = pl.pallas_call(
            _prenorm_linear_colsplit_kernel,
            out_shape=jax.ShapeDtypeStruct((M, D), x.dtype),
            grid=(grid_m, grid_n),
            in_specs=[
                pl.BlockSpec((tm, D), lambda i, j: (i, 0)),
                pl.BlockSpec((1, D), lambda i, j: (0, 0),
                             pipeline_mode=pl.Buffered(1)),
                pl.BlockSpec((1, D), lambda i, j: (0, 0),
                             pipeline_mode=pl.Buffered(1)),
                pl.BlockSpec((D, tn), lambda i, j: (0, j)),
                pl.BlockSpec((1, tn), lambda i, j: (0, j)),
            ],
            out_specs=pl.BlockSpec((tm, tn), lambda i, j: (i, j)),
            scratch_shapes=[pltpu.VMEM((tm, D), w.dtype)],
            compiler_params=_params(("parallel", "arbitrary")),
            cost_estimate=cost,
        )(x2, gamma2, beta2, w, wb2)

    return out2.reshape(B, N, D)


def _reference(x, gamma, beta, w, wb):
    xf = x.astype(jnp.float32)
    mean = jnp.mean(xf, axis=-1, keepdims=True)
    var = jnp.mean((xf - mean) ** 2, axis=-1, keepdims=True)
    y = (xf - mean) / jnp.sqrt(var + EPS) * gamma.astype(jnp.float32) \
        + beta.astype(jnp.float32)
    return y @ w.astype(jnp.float32) + wb.astype(jnp.float32)


def _make_inputs(key, B, N, D, w_dtype=jnp.float32):
    kx, kw, kb = jax.random.split(key, 3)
    x = jax.random.normal(kx, (B, N, D), dtype=jnp.float32)
    gamma = jnp.ones((D,), jnp.float32)       # nn.LayerNorm init
    beta = jnp.zeros((D,), jnp.float32)
    bound = 1.0 / np.sqrt(D)                  # nn.Linear init scale
    w = jax.random.uniform(kw, (D, D), minval=-bound, maxval=bound,
                           dtype=jnp.float32).astype(w_dtype)
    wb = jax.random.uniform(kb, (D,), minval=-bound, maxval=bound,
                            dtype=jnp.float32)
    return x, gamma, beta, w, wb


if __name__ == "__main__":
    # TODO(synk): `fn` in PreNorm is arbitrary; instantiated here as
    # Linear(dim, dim) (the usual transformer usage) and fused with the norm.
    root = jax.random.PRNGKey(0)
    k1, k2, k3, k4 = jax.random.split(root, 4)

    # 1) Primary small case (lane-dense D): batch=2, seq=8, dim=128.
    x, g, b, w, wb = _make_inputs(k1, 2, 8, 128)
    out = jax.block_until_ready(prenorm_linear(x, g, b, w, wb))
    np.testing.assert_allclose(np.asarray(out),
                               np.asarray(_reference(x, g, b, w, wb)),
                               rtol=1e-4, atol=1e-4)

    # 2) Ragged row count (M % tm != 0) -> exercises the unpadded last block.
    x, g, b, w, wb = _make_inputs(k2, 2, 7, 128)
    out = jax.block_until_ready(prenorm_linear(x, g, b, w, wb))
    np.testing.assert_allclose(np.asarray(out),
                               np.asarray(_reference(x, g, b, w, wb)),
                               rtol=1e-4, atol=1e-4)

    # 3) Column-split path forced (as used for large D on v7x).
    x, g, b, w, wb = _make_inputs(k3, 2, 8, 256)
    out = jax.block_until_ready(prenorm_linear(x, g, b, w, wb, col_block=128))
    np.testing.assert_allclose(np.asarray(out),
                               np.asarray(_reference(x, g, b, w, wb)),
                               rtol=1e-4, atol=1e-4)

    # 4) bf16 weight (recommended caller-side dtype): looser tolerance.
    x, g, b, w, wb = _make_inputs(k4, 2, 8, 128, w_dtype=jnp.bfloat16)
    out = jax.block_until_ready(prenorm_linear(x, g, b, w, wb))
    np.testing.assert_allclose(np.asarray(out),
                               np.asarray(_reference(x, g, b, w, wb)),
                               rtol=5e-2, atol=5e-2)

    print("KERNEL_OK")
</pallas_src>

<mosaic_0001>
module attributes {stable_mosaic.version = 11 : i64} {
  func.func @_prenorm_linear_kernel(%arg0: i32, %arg1: memref<8x128xf32, #tpu.memory_space<vmem>>, %arg2: memref<1x128xf32, #tpu.memory_space<vmem>>, %arg3: memref<1x128xf32, #tpu.memory_space<vmem>>, %arg4: memref<128x128xf32, #tpu.memory_space<vmem>>, %arg5: memref<1x128xf32, #tpu.memory_space<vmem>>, %arg6: memref<8x128xf32, #tpu.memory_space<vmem>>) attributes {dimension_semantics = [#tpu.dimension_semantics<parallel>], iteration_bounds = array<i64: 2>, scalar_prefetch = 0 : i64, scratch_operands = 0 : i64, tpu.core_type = #tpu.core_type<tc>, window_params = [{transform_indices = @transform_0, window_bounds = array<i64: 8, 128>}, {pipeline_mode = #tpu.pipeline_mode<synchronous>, transform_indices = @transform_1, window_bounds = array<i64: 1, 128>}, {pipeline_mode = #tpu.pipeline_mode<synchronous>, transform_indices = @transform_2, window_bounds = array<i64: 1, 128>}, {pipeline_mode = #tpu.pipeline_mode<synchronous>, transform_indices = @transform_3, window_bounds = array<i64: 128, 128>}, {pipeline_mode = #tpu.pipeline_mode<synchronous>, transform_indices = @transform_4, window_bounds = array<i64: 1, 128>}, {transform_indices = @transform_5, window_bounds = array<i64: 8, 128>}]} {
    %c0 = arith.constant 0 : index
    %c0_0 = arith.constant 0 : index
    %0 = vector.load %arg1[%c0, %c0_0] : memref<8x128xf32, #tpu.memory_space<vmem>>, vector<8x128xf32>
    %cst = arith.constant dense<0.000000e+00> : vector<8xf32>
    %1 = vector.multi_reduction <add>, %0, %cst [1] : vector<8x128xf32> to vector<8xf32>
    %2 = vector.shape_cast %1 : vector<8xf32> to vector<8x1xf32>
    %3 = arith.mulf %0, %0 : vector<8x128xf32>
    %cst_1 = arith.constant dense<0.000000e+00> : vector<8xf32>
    %4 = vector.multi_reduction <add>, %3, %cst_1 [1] : vector<8x128xf32> to vector<8xf32>
    %5 = vector.shape_cast %4 : vector<8xf32> to vector<8x1xf32>
    %cst_2 = arith.constant 7.812500e-03 : f32
    %6 = vector.broadcast %cst_2 : f32 to vector<8x1xf32>
    %7 = arith.mulf %2, %6 : vector<8x1xf32>
    %cst_3 = arith.constant 7.812500e-03 : f32
    %8 = vector.broadcast %cst_3 : f32 to vector<8x1xf32>
    %9 = arith.mulf %5, %8 : vector<8x1xf32>
    %10 = arith.mulf %7, %7 : vector<8x1xf32>
    %11 = arith.subf %9, %10 : vector<8x1xf32>
    %cst_4 = arith.constant 9.99999974E-6 : f32
    %12 = vector.broadcast %cst_4 : f32 to vector<8x1xf32>
    %13 = arith.addf %11, %12 : vector<8x1xf32>
    %14 = math.rsqrt %13 : vector<8x1xf32>
    %15 = vector.broadcast %7 : vector<8x1xf32> to vector<8x128xf32>
    %16 = arith.subf %0, %15 : vector<8x128xf32>
    %17 = vector.broadcast %14 : vector<8x1xf32> to vector<8x128xf32>
    %18 = arith.mulf %16, %17 : vector<8x128xf32>
    %c0_5 = arith.constant 0 : index
    %c0_6 = arith.constant 0 : index
    %19 = vector.load %arg2[%c0_5, %c0_6] : memref<1x128xf32, #tpu.memory_space<vmem>>, vector<1x128xf32>
    %20 = vector.broadcast %19 : vector<1x128xf32> to vector<8x128xf32>
    %21 = arith.mulf %18, %20 : vector<8x128xf32>
    %c0_7 = arith.constant 0 : index
    %c0_8 = arith.constant 0 : index
    %22 = vector.load %arg3[%c0_7, %c0_8] : memref<1x128xf32, #tpu.memory_space<vmem>>, vector<1x128xf32>
    %23 = vector.broadcast %22 : vector<1x128xf32> to vector<8x128xf32>
    %24 = arith.addf %21, %23 : vector<8x128xf32>
    %c0_9 = arith.constant 0 : index
    %c0_10 = arith.constant 0 : index
    %25 = vector.load %arg4[%c0_9, %c0_10] : memref<128x128xf32, #tpu.memory_space<vmem>>, vector<128x128xf32>
    %cst_11 = arith.constant dense<0.000000e+00> : vector<8x128xf32>
    %26 = tpu.matmul %24, %25, %cst_11 {dimension_numbers = #tpu.dot_dimension_numbers<[1], [0], [0], [1], [0, 0, 1, 1], [], []>} : vector<8x128xf32>, vector<128x128xf32>, vector<8x128xf32> -> vector<8x128xf32>
    %c0_12 = arith.constant 0 : index
    %c0_13 = arith.constant 0 : index
    %27 = vector.load %arg5[%c0_12, %c0_13] : memref<1x128xf32, #tpu.memory_space<vmem>>, vector<1x128xf32>
    %28 = vector.broadcast %27 : vector<1x128xf32> to vector<8x128xf32>
    %29 = arith.addf %26, %28 : vector<8x128xf32>
    %c0_14 = arith.constant 0 : index
    %c0_15 = arith.constant 0 : index
    %30 = vector.load %arg6[%c0_14, %c0_15] : memref<8x128xf32, #tpu.memory_space<vmem>>, vector<8x128xf32>
    tpu.vector_store %arg6[%c0_14, %c0_15], %29 {strides = array<i32>} : memref<8x128xf32, #tpu.memory_space<vmem>>, vector<8x128xf32>,
    return
  }
  func.func @transform_0(%arg0: i32) -> (i32, i32) {
    %c0_i32 = arith.constant 0 : i32
    %c0_i32_0 = arith.constant 0 : i32
    return %arg0, %c0_i32 : i32, i32
  }
  func.func @transform_1(%arg0: i32) -> (i32, i32) {
    %c0_i32 = arith.constant 0 : i32
    %c0_i32_0 = arith.constant 0 : i32
    %c0_i32_1 = arith.constant 0 : i32
    return %c0_i32, %c0_i32_0 : i32, i32
  }
  func.func @transform_2(%arg0: i32) -> (i32, i32) {
    %c0_i32 = arith.constant 0 : i32
    %c0_i32_0 = arith.constant 0 : i32
    %c0_i32_1 = arith.constant 0 : i32
    return %c0_i32, %c0_i32_0 : i32, i32
  }
  func.func @transform_3(%arg0: i32) -> (i32, i32) {
    %c0_i32 = arith.constant 0 : i32
    %c0_i32_0 = arith.constant 0 : i32
    %c0_i32_1 = arith.constant 0 : i32
    return %c0_i32, %c0_i32_0 : i32, i32
  }
  func.func @transform_4(%arg0: i32) -> (i32, i32) {
    %c0_i32 = arith.constant 0 : i32
    %c0_i32_0 = arith.constant 0 : i32
    %c0_i32_1 = arith.constant 0 : i32
    return %c0_i32, %c0_i32_0 : i32, i32
  }
  func.func @transform_5(%arg0: i32) -> (i32, i32) {
    %c0_i32 = arith.constant 0 : i32
    %c0_i32_0 = arith.constant 0 : i32
    return %arg0, %c0_i32 : i32, i32
  }
}

</mosaic_0001>

<llo_original>
// kernel: prenorm_linear.1
$region0: #{prenorm_linear.1}
  #allocation0 [shape = 'u32[]', space=smem, size = 0x4, offset = 0x4, fixed_abs, tag = 'smem constant byte address 0x4 - core index']
  #allocation1 [shape = 'u32[72,128]{1,0:T(1,128)}', space=vmem, size = 0x9000, scoped, tag = 'internal scratch']
  %s0 = inlined_call_operand.hbm [shape: f32[16,128], index: 0, kind: input, shape index: {}]
  %s1 = inlined_call_operand.vmem [shape: f32[1,128], index: 1, kind: input, shape index: {}]
  %s2 = inlined_call_operand.vmem [shape: f32[1,128], index: 2, kind: input, shape index: {}]
  %s3 = inlined_call_operand.hbm [shape: f32[128,128], index: 3, kind: input, shape index: {}]
  %s4 = inlined_call_operand.vmem [shape: f32[1,128], index: 4, kind: input, shape index: {}]
  %s5 = inlined_call_operand.hbm [shape: f32[16,128], index: 5, kind: output, shape index: {}]
  %s6 = sld [smem:[#allocation0]]
  $region61: #{prenorm_linear.1} parent=0
    _
  %s8 = ssub.s32 1, %s6
  %s9 = scalar_select 0, %s8, %s6
  $region1: #{prenorm_linear.1} parent=0
    #allocation2 [shape = 'u8[8192]{0}', space=vmem, size = 0x2000, scoped, tag = 'input window, operand 0']
    #allocation3 [shape = 's32[2]{0}', space=sflag, size = 0x8, scoped, tag = 'scoped memory for prenorm_linear.1']
    #allocation4 [shape = 's32[2]{0}', space=sflag, size = 0x8, scoped, tag = 'scoped memory for prenorm_linear.1']
    #allocation5 [shape = 'u8[65536]{0}', space=vmem, size = 0x10000, scoped, tag = 'input window, operand 3, single buffered']
    #allocation6 [shape = 's32[1]{0}', space=sflag, size = 0x4, scoped, tag = 'scoped memory for prenorm_linear.1']
    #allocation7 [shape = 'u8[8192]{0}', space=vmem, size = 0x2000, scoped, tag = 'output window, operand 0']
    %10 = vsyncpa [#allocation3], 0
    %s11 = scalar_lea.sflag [#allocation3], 1
    %12 = vsyncpa %s11, 0
    %13 = vsyncpa [#allocation6], 0
    %14 = vsyncpa [#allocation4], 0
    %s15 = scalar_lea.sflag [#allocation4], 1
    %16 = vsyncpa %s15, 0
    loop: start=0, step=1, limit=4
    $region2: #{prenorm_linear.1} parent=1 // loop_pre_header
      _
    $region3: #{prenorm_linear.1} parent=1 // loop_header
      %s18 = sphi 0, %s22
      %p19 = scmp.ge.s32.totalorder %s18, 4
      %s28 = sphi 0, %s30
      %s31 = sphi 0, %s28
      %s32 = sphi 0, %s31
      %s48 = sphi 0, %s32
      %s52 = sphi 0, %s52
      %s54 = sphi 0, %s52
      %s55 = sphi 0, %s54
      %s69 = sphi 0, %s55
      %s73 = sphi 0, %s73
      %s75 = sphi 0, %s73
      %s76 = sphi 0, %s75
      %s90 = sphi 0, %s76
      %s94 = sphi 0, %s94
      %s96 = sphi 0, %s94
      %s97 = sphi 0, %s96
      %s111 = sphi 0, %s97
      %s115 = sphi 0, %s115
      %s117 = sphi 0, %s115
      %s118 = sphi 0, %s117
      %s132 = sphi 0, %s118
      %s138 = sphi 0, %s140
      %s141 = sphi 0, %s138
      %s142 = sphi 0, %s141
      %s158 = sphi 0, %s142
    $region4: #{prenorm_linear.1} parent=1 // loop_header_branch
      %21 = sbr.rel (%p19) target = $region8
    $region5: #{prenorm_linear.1} parent=1 // loop_body
      %s23 = ssub.s32 %s18, 1
      %s24 = ssub.s32 %s18, 2
      %s25 = sadd.s32 %s18, 1
      %s26 = ssub.s32 %s18, %s25
      %p27 = scmp.eq.s32.totalorder %s26, 0
      %s29 = sadd.s32 %s28, 1
      %s30 = scalar_select %p27, %s28, %s29
      %p33 = pneg %p27
      %p34 = scmp.eq.s32.totalorder %s18, 1
      %p35 = por %p33, %p34
      %p36 = scmp.ne.s32.totalorder %s28, %s31
      %p37 = scmp.eq.s32.totalorder %s18, 0
      %p38 = por %p36, %p37
      %p39 = scmp.ne.s32.totalorder %s28, %s31
      %p40 = scmp.eq.s32.totalorder %s23, 1
      %p41 = por %p39, %p40
      %p42 = scmp.ne.s32.totalorder %s31, %s32
      %p43 = scmp.eq.s32.totalorder %s23, 0
      %p44 = por %p42, %p43
      %p45 = scmp.ne.s32.totalorder %s31, %s32
      %p46 = scmp.eq.s32.totalorder %s24, 1
      %p47 = por %p45, %p46
      %p49 = scmp.ne.s32.totalorder %s32, %s48
      %p50 = scmp.eq.s32.totalorder %s24, 0
      %p51 = por %p49, %p50
      %s53 = sadd.s32 %s52, 1
      %p56 = scmp.eq.s32.totalorder %s18, 1
      %p57 = scmp.ne.s32.totalorder %s52, %s54
      %p58 = scmp.eq.s32.totalorder %s18, 0
      %p59 = por %p57, %p58
      %p60 = scmp.ne.s32.totalorder %s52, %s54
      %p61 = scmp.eq.s32.totalorder %s23, 1
      %p62 = por %p60, %p61
      %p63 = scmp.ne.s32.totalorder %s54, %s55
      %p64 = scmp.eq.s32.totalorder %s23, 0
      %p65 = por %p63, %p64
      %p66 = scmp.ne.s32.totalorder %s54, %s55
      %p67 = scmp.eq.s32.totalorder %s24, 1
      %p68 = por %p66, %p67
      %p70 = scmp.ne.s32.totalorder %s55, %s69
      %p71 = scmp.eq.s32.totalorder %s24, 0
      %p72 = por %p70, %p71
      %s74 = sadd.s32 %s73, 1
      %p77 = scmp.eq.s32.totalorder %s18, 1
      %p78 = scmp.ne.s32.totalorder %s73, %s75
      %p79 = scmp.eq.s32.totalorder %s18, 0
      %p80 = por %p78, %p79
      %p81 = scmp.ne.s32.totalorder %s73, %s75
      %p82 = scmp.eq.s32.totalorder %s23, 1
      %p83 = por %p81, %p82
      %p84 = scmp.ne.s32.totalorder %s75, %s76
      %p85 = scmp.eq.s32.totalorder %s23, 0
      %p86 = por %p84, %p85
      %p87 = scmp.ne.s32.totalorder %s75, %s76
      %p88 = scmp.eq.s32.totalorder %s24, 1
      %p89 = por %p87, %p88
      %p91 = scmp.ne.s32.totalorder %s76, %s90
      %p92 = scmp.eq.s32.totalorder %s24, 0
      %p93 = por %p91, %p92
      %s95 = sadd.s32 %s94, 1
      %p98 = scmp.eq.s32.totalorder %s18, 1
      %p99 = scmp.ne.s32.totalorder %s94, %s96
      %p100 = scmp.eq.s32.totalorder %s18, 0
      %p101 = por %p99, %p100
      %p102 = scmp.ne.s32.totalorder %s94, %s96
      %p103 = scmp.eq.s32.totalorder %s23, 1
      %p104 = por %p102, %p103
      %p105 = scmp.ne.s32.totalorder %s96, %s97
      %p106 = scmp.eq.s32.totalorder %s23, 0
      %p107 = por %p105, %p106
      %p108 = scmp.ne.s32.totalorder %s96, %s97
      %p109 = scmp.eq.s32.totalorder %s24, 1
      %p110 = por %p108, %p109
      %p112 = scmp.ne.s32.totalorder %s97, %s111
      %p113 = scmp.eq.s32.totalorder %s24, 0
      %p114 = por %p112, %p113
      %s116 = sadd.s32 %s115, 1
      %p119 = scmp.eq.s32.totalorder %s18, 1
      %p120 = scmp.ne.s32.totalorder %s115, %s117
      %p121 = scmp.eq.s32.totalorder %s18, 0
      %p122 = por %p120, %p121
      %p123 = scmp.ne.s32.totalorder %s115, %s117
      %p124 = scmp.eq.s32.totalorder %s23, 1
      %p125 = por %p123, %p124
      %p126 = scmp.ne.s32.totalorder %s117, %s118
      %p127 = scmp.eq.s32.totalorder %s23, 0
      %p128 = por %p126, %p127
      %p129 = scmp.ne.s32.totalorder %s117, %s118
      %p130 = scmp.eq.s32.totalorder %s24, 1
      %p131 = por %p129, %p130
      %p133 = scmp.ne.s32.totalorder %s118, %s132
      %p134 = scmp.eq.s32.totalorder %s24, 0
      %p135 = por %p133, %p134
      %s136 = ssub.s32 %s18, %s25
      %p137 = scmp.eq.s32.totalorder %s136, 0
      %s139 = sadd.s32 %s138, 1
      %s140 = scalar_select %p137, %s138, %s139
      %p143 = pneg %p137
      %p144 = scmp.eq.s32.totalorder %s18, 1
      %p145 = por %p143, %p144
      %p146 = scmp.ne.s32.totalorder %s138, %s141
      %p147 = scmp.eq.s32.totalorder %s18, 0
      %p148 = por %p146, %p147
      %p149 = scmp.ne.s32.totalorder %s138, %s141
      %p150 = scmp.eq.s32.totalorder %s23, 1
      %p151 = por %p149, %p150
      %p152 = scmp.ne.s32.totalorder %s141, %s142
      %p153 = scmp.eq.s32.totalorder %s23, 0
      %p154 = por %p152, %p153
      %p155 = scmp.ne.s32.totalorder %s141, %s142
      %p156 = scmp.eq.s32.totalorder %s24, 1
      %p157 = por %p155, %p156
      %p159 = scmp.ne.s32.totalorder %s142, %s158
      %p160 = scmp.eq.s32.totalorder %s24, 0
      %p161 = por %p159, %p160
      %p162 = scmp.le.s32.totalorder 1, %s18
      %p163 = scmp.lt.s32.totalorder %s18, 3
      %p164 = pnand %p162, %p163
      %p165 = pneg %p164
      // Predicated region
      $region9: #{prenorm_linear.1} parent=5 // pred_check
        _
      $region10: #{prenorm_linear.1} parent=5 // pred_check_branch
        %167 = sbr.rel (%p164) target = $region12
      $region11: #{prenorm_linear.1} parent=5 // pred_region
        %s168 = ssub.s32 %s18, 1
        // Predicated region
        $region13: #{prenorm_linear.1} parent=11 // pred_check
          %p169 = pneg %p65
        $region14: #{prenorm_linear.1} parent=11 // pred_check_branch
          %171 = sbr.rel (%p169) target = $region16
        $region15: #{prenorm_linear.1} parent=11 // pred_region
          _
        $region16: #{prenorm_linear.1} parent=11 // pred_fallthru
          _
        // Predicated region
        $region17: #{prenorm_linear.1} parent=11 // pred_check
          %p172 = pneg %p86
        $region18: #{prenorm_linear.1} parent=11 // pred_check_branch
          %174 = sbr.rel (%p172) target = $region20
        $region19: #{prenorm_linear.1} parent=11 // pred_region
          _
        $region20: #{prenorm_linear.1} parent=11 // pred_fallthru
          _
        // Predicated region
        $region21: #{prenorm_linear.1} parent=11 // pred_check
          %p175 = pneg %p107
        $region22: #{prenorm_linear.1} parent=11 // pred_check_branch
          %177 = sbr.rel (%p175) target = $region24
        $region23: #{prenorm_linear.1} parent=11 // pred_region
          %179 = vsyncadd [#allocation6], 0
          %s180 = sshll.u32 %s3, 4
          %s181 = int_to_ptr.hbm [resolvable:$true] %s180
          %s182 = sshll.u32 [#allocation5], 4
          %s183 = int_to_ptr.vmem [resolvable:$true] %s182
          %188 = dma.hbm_to_vmem [thread:$0]  %s181, 2048, %s183, [#allocation6], 128, 128, 8
        $region24: #{prenorm_linear.1} parent=11 // pred_fallthru
          _
        // Predicated region
        $region25: #{prenorm_linear.1} parent=11 // pred_check
          %p189 = pneg %p128
        $region26: #{prenorm_linear.1} parent=11 // pred_check_branch
          %191 = sbr.rel (%p189) target = $region28
        $region27: #{prenorm_linear.1} parent=11 // pred_region
          _
        $region28: #{prenorm_linear.1} parent=11 // pred_fallthru
          _
      $region12: #{prenorm_linear.1} parent=5 // pred_fallthru
        _
      %p192 = scmp.lt.s32.totalorder %s18, 2
      // Predicated region
      $region29: #{prenorm_linear.1} parent=5 // pred_check
        %p193 = pneg %p192
      $region30: #{prenorm_linear.1} parent=5 // pred_check_branch
        %195 = sbr.rel (%p193) target = $region32
      $region31: #{prenorm_linear.1} parent=5 // pred_region
        // Predicated region
        $region33: #{prenorm_linear.1} parent=31 // pred_check
          %p196 = pneg %p38
        $region34: #{prenorm_linear.1} parent=31 // pred_check_branch
          %198 = sbr.rel (%p196) target = $region36
        $region35: #{prenorm_linear.1} parent=31 // pred_region
          %s199 = sand.u32 %s28, 1
          %s200 = scalar_lea.sflag [#allocation3], %s199
          %s201 = sand.u32 %s28, 1
          %s202 = smul.addr %s201, 8
          %s203 = scalar_lea.vmem [#allocation2], %s202
          %205 = vsyncadd %s200, 0
          %s206 = smul.addr %s18, 8
          %s207 = scalar_lea.hbm %s0, %s206
          %s209 = sshll.u32 %s207, 4
          %s210 = int_to_ptr.hbm [resolvable:$true] %s209
          %s211 = sshll.u32 %s203, 4
          %s212 = int_to_ptr.vmem [resolvable:$true] %s211
          %214 = dma.hbm_to_vmem [thread:$0]  %s210, 128, %s212, %s200
        $region36: #{prenorm_linear.1} parent=31 // pred_fallthru
          _
      $region32: #{prenorm_linear.1} parent=5 // pred_fallthru
        _
      %p215 = scmp.le.s32.totalorder 1, %s18
      %p216 = scmp.lt.s32.totalorder %s18, 3
      %p217 = pnand %p215, %p216
      %p218 = pneg %p217
      // Predicated region
      $region37: #{prenorm_linear.1} parent=5 // pred_check
        _
      $region38: #{prenorm_linear.1} parent=5 // pred_check_branch
        %220 = sbr.rel (%p217) target = $region40
      $region39: #{prenorm_linear.1} parent=5 // pred_region
        %s221 = ssub.s32 %s18, 1
        %s222 = sand.u32 %s31, 1
        %s223 = scalar_lea.sflag [#allocation3], %s222
        %s224 = sand.u32 %s31, 1
        %s225 = smul.addr %s224, 8
        %s226 = scalar_lea.vmem [#allocation2], %s225
        // Predicated region
        $region41: #{prenorm_linear.1} parent=39 // pred_check
          %p227 = pneg %p44
        $region42: #{prenorm_linear.1} parent=39 // pred_check_branch
          %229 = sbr.rel (%p227) target = $region44
        $region43: #{prenorm_linear.1} parent=39 // pred_region
          %231 = dma.done %s223, 128
        $region44: #{prenorm_linear.1} parent=39 // pred_fallthru
          _
        // Predicated region
        $region45: #{prenorm_linear.1} parent=39 // pred_check
          %p232 = pneg %p107
        $region46: #{prenorm_linear.1} parent=39 // pred_check_branch
          %234 = sbr.rel (%p232) target = $region48
        $region47: #{prenorm_linear.1} parent=39 // pred_region
          %236 = dma.done [#allocation6], 2048
        $region48: #{prenorm_linear.1} parent=39 // pred_fallthru
          _
        %s237 = sand.u32 %s31, 1
        %s238 = scalar_lea.sflag [#allocation3], %s237
        %s239 = sand.u32 %s31, 1
        %s240 = smul.addr %s239, 8
        %s241 = scalar_lea.vmem [#allocation2], %s240
        %p242 = pneg %p44
        %p243 = pneg %p41
        %p244 = pneg %p65
        %p245 = pneg %p62
        %p246 = pneg %p86
        %p247 = pneg %p83
        %p248 = pneg %p107
        %p249 = pneg %p104
        %p250 = pneg %p128
        %p251 = pneg %p125
        %p252 = pneg %p154
        %p253 = pneg %p151
        %s254 = sand.u32 %s141, 1
        %s255 = scalar_lea.sflag [#allocation4], %s254
        %s256 = sand.u32 %s141, 1
        %s257 = smul.addr %s256, 8
        %s258 = scalar_lea.vmem [#allocation7], %s257
        %v259 = vld [vmem:[%s226] sm:$0xff]
        %260 = vadd.xlane.f32.xlu0 %v259
        %v261 = vpop.xlane.xlu0 %260
        %v262 = vmul.f32 %v259, %v259
        %263 = vadd.xlane.f32.xlu0 %v262
        %v264 = vpop.xlane.xlu0 %263
        %v265 = vmul.f32 %v261, 0.0078125
        %v266 = vmul.f32 %v264, 0.0078125
        %v267 = vmul.f32 %v265, %v265
        %v268 = vsub.f32 %v266, %v267
        %v269 = vadd.f32 %v268, 1e-05
        %v270 = vrsqrt.pop %v269
        %v271 = vmul.f32 %v270, %v269
        %v272 = vmul.f32 %v271, %v270
        %v273 = vmul.f32 0.5, %v272
        %v274 = vsub.f32 1.5, %v273
        %v275 = vmul.f32 %v270, %v274
        %vm276 = vweird.f32 %v269
        %vm277 = vweird.f32 %v270
        %vm278 = vmor %vm276, %vm277
        %v279 = vsel %vm278, %v270, %v275
        %v280 = vsub.f32 %v259, %v265
        %v281 = vmul.f32 %v280, %v279
        %v282 = vld [vmem:[%s1] sm:$0x1]
        %v284 = vperm.slane %v282, 0
        %v286 = vmul.f32 %v281, %v284
        %v287 = vld [vmem:[%s2] sm:$0x1]
        %v289 = vperm.slane %v287, 0
        %v291 = vadd.f32 %v286, %v289
        %v292 = vld [vmem:[#allocation5] sm:$0xff]
        %v293 = vld [vmem:[#allocation5 + $0x8] sm:$0xff]
        %v294 = vld [vmem:[#allocation5 + $0x10] sm:$0xff]
        %v295 = vld [vmem:[#allocation5 + $0x18] sm:$0xff]
        %v296 = vld [vmem:[#allocation5 + $0x20] sm:$0xff]
        %v297 = vld [vmem:[#allocation5 + $0x28] sm:$0xff]
        %v298 = vld [vmem:[#allocation5 + $0x30] sm:$0xff]
        %v299 = vld [vmem:[#allocation5 + $0x38] sm:$0xff]
        %v300 = vld [vmem:[#allocation5 + $0x40] sm:$0xff]
        %v301 = vld [vmem:[#allocation5 + $0x48] sm:$0xff]
        %v302 = vld [vmem:[#allocation5 + $0x50] sm:$0xff]
        %v303 = vld [vmem:[#allocation5 + $0x58] sm:$0xff]
        %v304 = vld [vmem:[#allocation5 + $0x60] sm:$0xff]
        %v305 = vld [vmem:[#allocation5 + $0x68] sm:$0xff]
        %v306 = vld [vmem:[#allocation5 + $0x70] sm:$0xff]
        %v307 = vld [vmem:[#allocation5 + $0x78] sm:$0xff]
        %v308 = vld [vmem:[%s4] sm:$0x1]
        %v310 = vperm.slane %v308, 0
        %312 = vmatpush.msra.mxu0 %v307
        %313 = vmatpush.msra.mxu0 %v306
        %314 = vmatpush.msra.mxu0 %v305
        %315 = vmatpush.msra.mxu0 %v304
        %316 = vmatpush.msra.mxu0 %v303
        %317 = vmatpush.msra.mxu0 %v302
        %318 = vmatpush.msra.mxu0 %v301
        %319 = vmatpush.msra.mxu0 %v300
        %320 = vmatpush.msra.mxu0 %v299
        %321 = vmatpush.msra.mxu0 %v298
        %322 = vmatpush.msra.mxu0 %v297
        %323 = vmatpush.msra.mxu0 %v296
        %324 = vmatpush.msra.mxu0 %v295
        %325 = vmatpush.msra.mxu0 %v294
        %326 = vmatpush.msra.mxu0 %v293
        %327 = vmatpush.msra.mxu0 %v292
        %328 = vmatmul.f32.gmra.mxu0 %v291
        %v329 = vpop.f32.mrf.mxu0
        %v330 = vadd.f32 %v310, %v329
        %331 = vdwg.mxu0
        %332 = vst [vmem:[%s258] sm:$0xff] %v330
        %s333 = sand.u32 %s141, 1
        %s334 = scalar_lea.sflag [#allocation4], %s333
        %s335 = sand.u32 %s141, 1
        %s336 = smul.addr %s335, 8
        %s337 = scalar_lea.vmem [#allocation7], %s336
        // Predicated region
        $region49: #{prenorm_linear.1} parent=39 // pred_check
          %p338 = pneg %p151
        $region50: #{prenorm_linear.1} parent=39 // pred_check_branch
          %340 = sbr.rel (%p338) target = $region52
        $region51: #{prenorm_linear.1} parent=39 // pred_region
          %342 = vsyncadd %s334, 0
          %s343 = smul.addr %s23, 8
          %s344 = scalar_lea.hbm %s5, %s343
          %s346 = sshll.u32 %s337, 4
          %s347 = int_to_ptr.vmem [resolvable:$true] %s346
          %s348 = sshll.u32 %s344, 4
          %s349 = int_to_ptr.hbm [resolvable:$true] %s348
          %351 = dma.vmem_to_hbm [thread:$0]  %s347, 128, %s349, %s334
        $region52: #{prenorm_linear.1} parent=39 // pred_fallthru
          _
      $region40: #{prenorm_linear.1} parent=5 // pred_fallthru
        _
      %p352 = scmp.le.s32.totalorder 2, %s18
      // Predicated region
      $region53: #{prenorm_linear.1} parent=5 // pred_check
        %p353 = pneg %p352
      $region54: #{prenorm_linear.1} parent=5 // pred_check_branch
        %355 = sbr.rel (%p353) target = $region56
      $region55: #{prenorm_linear.1} parent=5 // pred_region
        %s356 = ssub.s32 %s18, 2
        // Predicated region
        $region57: #{prenorm_linear.1} parent=55 // pred_check
          %p357 = pneg %p157
        $region58: #{prenorm_linear.1} parent=55 // pred_check_branch
          %359 = sbr.rel (%p357) target = $region60
        $region59: #{prenorm_linear.1} parent=55 // pred_region
          %s360 = sand.u32 %s142, 1
          %s361 = scalar_lea.sflag [#allocation4], %s360
          %s362 = sand.u32 %s142, 1
          %s363 = smul.addr %s362, 8
          %s364 = scalar_lea.vmem [#allocation7], %s363
          %366 = dma.done %s361, 128
        $region60: #{prenorm_linear.1} parent=55 // pred_fallthru
          _
      $region56: #{prenorm_linear.1} parent=5 // pred_fallthru
        _
    $region6: #{prenorm_linear.1} parent=1 // loop_footer
      %s22 = sadd.s32 1, %s18
    $region7: #{prenorm_linear.1} parent=1 // loop_footer_branch
      %17 = sbr.rel target = $region3
    $region8: #{prenorm_linear.1} parent=1 // loop_exit
      _
    %367 = vsyncpa [#allocation3], 1
    %s368 = scalar_lea.sflag [#allocation3], 1
    %369 = vsyncpa %s368, 1
    %370 = vsyncpa [#allocation6], 1
    %371 = vsyncpa [#allocation4], 1
    %s372 = scalar_lea.sflag [#allocation4], 1
    %373 = vsyncpa %s372, 1

</llo_original>
